<compile_context>
chip_gen: v5e
topology: v5e:2x2
jax: 0.10.0
libtpu: 0.0.40
codegen_flags: <defaults>
</compile_context>

<pallas_src>
import jax
import jax.numpy as jnp
from jax import lax
from jax.experimental import pallas as pl
from jax.experimental.pallas import tpu as pltpu


def _leaky(x, slope=0.1):
    return jnp.where(x > 0, x, slope * x)


def residual_block_kernel(x_ref, xt_ref, xb_ref, w1_ref, b1_ref, w2_ref,
                          b2_ref, out_ref):
    # x_ref  : [1, C, TB]     main tile of x, spatial flattened (TB = tile_rows*W)
    # xt_ref : [1, 1, C, W]   x row just above the tile (zeros at image top)
    # xb_ref : [1, 1, C, W]   x row just below the tile (zeros at image bottom)
    # w1_ref : [C, C]         1x1 conv weight [Cout, Cin], BN scale folded in
    # b1_ref : [C, 1]         folded BN bias for conv1 (f32)
    # w2_ref : [C, 9*C]       3x3 conv weight, col = (3*dy+dx)*C + ci, BN folded
    # b2_ref : [C, 1]         folded BN bias for conv2 (f32)
    # out_ref: [1, C, TB]
    C = x_ref.shape[1]
    TB = x_ref.shape[2]
    W = xt_ref.shape[3]
    TBW = TB + 2 * W

    i = pl.program_id(1)
    n_row_tiles = pl.num_programs(1)

    x_main = x_ref[...].reshape(C, TB)
    x_top = xt_ref[...].reshape(C, W)
    x_bot = xb_ref[...].reshape(C, W)

    # x window covering the tile rows plus one halo row above / below.
    xwin = jnp.concatenate([x_top, x_main, x_bot], axis=1)          # (C, TB+2W)

    # ---- conv1: 1x1 conv (channel matmul) + folded BN + LeakyReLU(0.1),
    #      computed for the halo rows too (conv1 is pointwise).
    h1 = jnp.dot(w1_ref[...], xwin, preferred_element_type=jnp.float32)
    h1 = _leaky(h1 + b1_ref[...])                                    # f32

    # Halo rows that fall outside the image must be exactly zero
    # (they are conv2's zero padding, NOT conv1(0)).
    top_ok = jnp.where(i > 0, 1.0, 0.0)
    bot_ok = jnp.where(i < n_row_tiles - 1, 1.0, 0.0)
    pos = lax.broadcasted_iota(jnp.int32, (1, TBW), 1)
    halo_mask = jnp.where(pos < W, top_ok,
                          jnp.where(pos >= W + TB, bot_ok, 1.0))
    h1 = (h1 * halo_mask).astype(w2_ref.dtype)

    # One extra zero column on each side so every 3x3 tap is a static,
    # in-bounds lane slice (the corner elements it covers are masked anyway).
    zcol = jnp.zeros((C, 1), h1.dtype)
    hwin = jnp.concatenate([zcol, h1, zcol], axis=1)                 # (C, TB+2W+2)

    # Column masks implementing zero padding in the W direction.
    col = lax.broadcasted_iota(jnp.int32, (1, TB), 1) % W
    not_left = col != 0
    not_right = col != (W - 1)

    taps = []
    for dy in range(3):
        for dx in range(3):
            s = dy * W + dx
            t = hwin[:, s:s + TB]                                    # (C, TB)
            if dx == 0:
                t = jnp.where(not_left, t, 0)
            elif dx == 2:
                t = jnp.where(not_right, t, 0)
            taps.append(t)
    patches = jnp.concatenate(taps, axis=0)                          # (9C, TB)

    # ---- conv2: 3x3 conv (pad=1) + folded BN as ONE fused im2col matmul.
    h2 = jnp.dot(w2_ref[...], patches, preferred_element_type=jnp.float32)
    h2 = h2 + b2_ref[...]

    # ---- residual add + LeakyReLU(0.1), f32 epilogue, lane-dense store.
    out = _leaky(x_main.astype(jnp.float32) + h2)
    out_ref[...] = out.reshape(out_ref.shape).astype(out_ref.dtype)


def _choose_tile_rows(H, W, C, itemsize=4, target_bytes=2 << 20):
    """Largest row-tile dividing H whose lane extent is a multiple of 128
    and whose x block stays under ~2 MiB (keeps double-buffered VMEM small
    enough for v7x's 64 MiB while giving big enough blocks for pipelining)."""
    best = None
    for th in range(1, H + 1):
        if H % th:
            continue
        tb = th * W
        if tb % 128 != 0 and th != H:
            continue
        if C * tb * itemsize > target_bytes and best is not None:
            break
        best = th
    return best if best is not None else H


def residual_block(x_nchw, w1_mat, b1_vec, w2_mat, b2_vec, *,
                   tile_rows=None, compute_dtype=None):
    """x_nchw: (N, C, H, W). w1_mat: (C, C) [Cout, Cin]. w2_mat: (C, 9*C).
    compute_dtype: set to jnp.bfloat16 on v6e/v7x for MXU/DMA savings."""
    N, C, H, W = x_nchw.shape
    if compute_dtype is None:
        compute_dtype = x_nchw.dtype
    itemsize = jnp.dtype(compute_dtype).itemsize
    if tile_rows is None:
        tile_rows = _choose_tile_rows(H, W, C, itemsize)
    assert H % tile_rows == 0, "tile_rows must divide H"
    n_tiles = H // tile_rows
    TB = tile_rows * W
    L = H * W

    xc = x_nchw.astype(compute_dtype)
    x_flat = xc.reshape(N, C, L)

    # Thin halo inputs: the single x row above / below each tile
    # (zero-filled at the image borders; the kernel masks those anyway).
    zero_row = jnp.zeros((N, C, 1, W), compute_dtype)
    top_rows = xc[:, :, tile_rows - 1::tile_rows, :][:, :, :n_tiles - 1, :]
    x_top = jnp.concatenate([zero_row, top_rows], axis=2)            # (N,C,T,W)
    bot_rows = xc[:, :, tile_rows::tile_rows, :]
    x_bot = jnp.concatenate([bot_rows, zero_row], axis=2)            # (N,C,T,W)
    x_top = jnp.transpose(x_top, (0, 2, 1, 3))                       # (N,T,C,W)
    x_bot = jnp.transpose(x_bot, (0, 2, 1, 3))

    w1c = w1_mat.astype(compute_dtype)
    w2c = w2_mat.astype(compute_dtype)
    b1c = b1_vec.reshape(C, 1).astype(jnp.float32)
    b2c = b2_vec.reshape(C, 1).astype(jnp.float32)

    out_flat = pl.pallas_call(
        residual_block_kernel,
        out_shape=jax.ShapeDtypeStruct((N, C, L), x_nchw.dtype),
        grid=(N, n_tiles),
        in_specs=[
            pl.BlockSpec((1, C, TB), lambda n, i: (n, 0, i)),
            pl.BlockSpec((1, 1, C, W), lambda n, i: (n, i, 0, 0)),
            pl.BlockSpec((1, 1, C, W), lambda n, i: (n, i, 0, 0)),
            pl.BlockSpec((C, C), lambda n, i: (0, 0)),
            pl.BlockSpec((C, 1), lambda n, i: (0, 0)),
            pl.BlockSpec((C, 9 * C), lambda n, i: (0, 0)),
            pl.BlockSpec((C, 1), lambda n, i: (0, 0)),
        ],
        out_specs=pl.BlockSpec((1, C, TB), lambda n, i: (n, 0, i)),
        compiler_params=pltpu.CompilerParams(
            dimension_semantics=("parallel", "parallel")),
    )(x_flat, x_top, x_bot, w1c, b1c, w2c, b2c)

    return out_flat.reshape(N, C, H, W)


def fold_bn(gamma, beta, mean, var, eps=1e-5):
    scale = gamma / jnp.sqrt(var + eps)
    bias = beta - mean * scale
    return scale, bias


def reference_forward(x_nchw, w1_mat, b1_vec, w2_oihw, b2_vec):
    # Plain-JAX reference (same math) for sanity checking.
    h = jnp.einsum("oi,nihw->nohw", w1_mat, x_nchw) + b1_vec[None, :, None, None]
    h = _leaky(h)
    h = lax.conv_general_dilated(
        h, w2_oihw, window_strides=(1, 1), padding=((1, 1), (1, 1)),
        dimension_numbers=("NCHW", "OIHW", "NCHW"))
    h = h + b2_vec[None, :, None, None]
    return _leaky(x_nchw + h)


if __name__ == "__main__":
    key = jax.random.PRNGKey(0)
    N, C, H, W = 2, 4, 16, 16   # in_ch = 4
    keys = jax.random.split(key, 12)

    # input, NCHW like the PyTorch module
    x_nchw = jax.random.normal(keys[0], (N, C, H, W), jnp.float32)

    # conv1: 1x1, PyTorch weight [Cout, Cin, 1, 1] -> [Cout, Cin], fold BN
    w1_raw = jax.random.normal(keys[1], (C, C), jnp.float32) * 0.1
    g1 = 1.0 + 0.1 * jax.random.normal(keys[2], (C,), jnp.float32)
    be1 = 0.1 * jax.random.normal(keys[3], (C,), jnp.float32)
    mu1 = 0.1 * jax.random.normal(keys[4], (C,), jnp.float32)
    va1 = jnp.abs(jax.random.normal(keys[5], (C,), jnp.float32)) + 0.5
    s1, b1_vec = fold_bn(g1, be1, mu1, va1)
    w1_mat = w1_raw * s1[:, None]

    # conv2: 3x3, PyTorch weight OIHW [Cout, Cin, 3, 3], fold BN
    w2_raw = jax.random.normal(keys[6], (C, C, 3, 3), jnp.float32) * 0.1
    g2 = 1.0 + 0.1 * jax.random.normal(keys[7], (C,), jnp.float32)
    be2 = 0.1 * jax.random.normal(keys[8], (C,), jnp.float32)
    mu2 = 0.1 * jax.random.normal(keys[9], (C,), jnp.float32)
    va2 = jnp.abs(jax.random.normal(keys[10], (C,), jnp.float32)) + 0.5
    s2, b2_vec = fold_bn(g2, be2, mu2, va2)
    w2_oihw = w2_raw * s2[:, None, None, None]
    # pack taps for the fused im2col matmul: column = (3*dy + dx) * Cin + ci
    w2_mat = jnp.transpose(w2_oihw, (0, 2, 3, 1)).reshape(C, 9 * C)

    # tile_rows=8 -> 2 row tiles per image: exercises the halo path and the
    # (N, n_tiles)=(2,2) pipelined grid.  Lane extent per tile = 8*16 = 128.
    out = residual_block(x_nchw, w1_mat, b1_vec, w2_mat, b2_vec, tile_rows=8)
    out = jax.block_until_ready(out)

    ref = reference_forward(x_nchw, w1_mat, b1_vec, w2_oihw, b2_vec)
    assert out.shape == ref.shape
    assert jnp.allclose(out, ref, atol=1e-2, rtol=1e-2), "mismatch vs reference"

    print("KERNEL_OK")
</pallas_src>

<mosaic_0001>
module attributes {stable_mosaic.version = 11 : i64} {
  func.func @residual_block_kernel(%arg0: i32, %arg1: i32, %arg2: memref<1x4x128xf32, #tpu.memory_space<vmem>>, %arg3: memref<1x1x4x16xf32, #tpu.memory_space<vmem>>, %arg4: memref<1x1x4x16xf32, #tpu.memory_space<vmem>>, %arg5: memref<4x4xf32, #tpu.memory_space<vmem>>, %arg6: memref<4x1xf32, #tpu.memory_space<vmem>>, %arg7: memref<4x36xf32, #tpu.memory_space<vmem>>, %arg8: memref<4x1xf32, #tpu.memory_space<vmem>>, %arg9: memref<1x4x128xf32, #tpu.memory_space<vmem>>) attributes {dimension_semantics = [#tpu.dimension_semantics<parallel>, #tpu.dimension_semantics<parallel>], iteration_bounds = array<i64: 2, 2>, scalar_prefetch = 0 : i64, scratch_operands = 0 : i64, tpu.core_type = #tpu.core_type<tc>, window_params = [{transform_indices = @transform_0, window_bounds = array<i64: 1, 4, 128>}, {transform_indices = @transform_1, window_bounds = array<i64: 1, 1, 4, 16>}, {transform_indices = @transform_2, window_bounds = array<i64: 1, 1, 4, 16>}, {pipeline_mode = #tpu.pipeline_mode<synchronous>, transform_indices = @transform_3, window_bounds = array<i64: 4, 4>}, {pipeline_mode = #tpu.pipeline_mode<synchronous>, transform_indices = @transform_4, window_bounds = array<i64: 4, 1>}, {pipeline_mode = #tpu.pipeline_mode<synchronous>, transform_indices = @transform_5, window_bounds = array<i64: 4, 36>}, {pipeline_mode = #tpu.pipeline_mode<synchronous>, transform_indices = @transform_6, window_bounds = array<i64: 4, 1>}, {transform_indices = @transform_7, window_bounds = array<i64: 1, 4, 128>}]} {
    %c0 = arith.constant 0 : index
    %c0_0 = arith.constant 0 : index
    %c0_1 = arith.constant 0 : index
    %0 = vector.load %arg2[%c0, %c0_0, %c0_1] : memref<1x4x128xf32, #tpu.memory_space<vmem>>, vector<1x4x128xf32>
    %1 = vector.shape_cast %0 : vector<1x4x128xf32> to vector<4x128xf32>
    %c0_2 = arith.constant 0 : index
    %c0_3 = arith.constant 0 : index
    %c0_4 = arith.constant 0 : index
    %c0_5 = arith.constant 0 : index
    %2 = vector.load %arg3[%c0_2, %c0_3, %c0_4, %c0_5] : memref<1x1x4x16xf32, #tpu.memory_space<vmem>>, vector<1x1x4x16xf32>
    %3 = vector.shape_cast %2 : vector<1x1x4x16xf32> to vector<4x16xf32>
    %c0_6 = arith.constant 0 : index
    %c0_7 = arith.constant 0 : index
    %c0_8 = arith.constant 0 : index
    %c0_9 = arith.constant 0 : index
    %4 = vector.load %arg4[%c0_6, %c0_7, %c0_8, %c0_9] : memref<1x1x4x16xf32, #tpu.memory_space<vmem>>, vector<1x1x4x16xf32>
    %5 = vector.shape_cast %4 : vector<1x1x4x16xf32> to vector<4x16xf32>
    %6 = tpu.concatenate %3, %1, %5 in 1 : vector<4x16xf32>, vector<4x128xf32>, vector<4x16xf32> -> vector<4x160xf32>
    %c0_10 = arith.constant 0 : index
    %c0_11 = arith.constant 0 : index
    %7 = vector.load %arg5[%c0_10, %c0_11] : memref<4x4xf32, #tpu.memory_space<vmem>>, vector<4x4xf32>
    %cst = arith.constant dense<0.000000e+00> : vector<4x160xf32>
    %8 = tpu.matmul %7, %6, %cst {dimension_numbers = #tpu.dot_dimension_numbers<[1], [0], [0], [1], [0, 0, 1, 1], [], []>} : vector<4x4xf32>, vector<4x160xf32>, vector<4x160xf32> -> vector<4x160xf32>
    %c0_12 = arith.constant 0 : index
    %c0_13 = arith.constant 0 : index
    %9 = vector.load %arg6[%c0_12, %c0_13] : memref<4x1xf32, #tpu.memory_space<vmem>>, vector<4x1xf32>
    %10 = vector.broadcast %9 : vector<4x1xf32> to vector<4x160xf32>
    %11 = arith.addf %8, %10 : vector<4x160xf32>
    %cst_14 = arith.constant 0.000000e+00 : f32
    %12 = vector.broadcast %cst_14 : f32 to vector<4x160xf32>
    %13 = arith.cmpf ogt, %11, %12 : vector<4x160xf32>
    %cst_15 = arith.constant 1.000000e-01 : f32
    %14 = vector.broadcast %cst_15 : f32 to vector<4x160xf32>
    %15 = arith.mulf %14, %11 : vector<4x160xf32>
    %16 = arith.select %13, %11, %15 : vector<4x160xi1>, vector<4x160xf32>
    %c0_i32 = arith.constant 0 : i32
    %17 = arith.cmpi sgt, %arg1, %c0_i32 : i32
    %cst_16 = arith.constant 1.000000e+00 : f32
    %cst_17 = arith.constant 0.000000e+00 : f32
    %18 = arith.select %17, %cst_16, %cst_17 : f32
    %c1_i32 = arith.constant 1 : i32
    %19 = arith.cmpi slt, %arg1, %c1_i32 : i32
    %cst_18 = arith.constant 1.000000e+00 : f32
    %cst_19 = arith.constant 0.000000e+00 : f32
    %20 = arith.select %19, %cst_18, %cst_19 : f32
    %21 = tpu.iota {dimensions = array<i32: 1>} : vector<1x160xi32>
    %c16_i32 = arith.constant 16 : i32
    %22 = vector.broadcast %c16_i32 : i32 to vector<1x160xi32>
    %23 = arith.cmpi slt, %21, %22 : vector<1x160xi32>
    %c144_i32 = arith.constant 144 : i32
    %24 = vector.broadcast %c144_i32 : i32 to vector<1x160xi32>
    %25 = arith.cmpi sge, %21, %24 : vector<1x160xi32>
    %cst_20 = arith.constant 1.000000e+00 : f32
    %26 = vector.broadcast %20 : f32 to vector<1x160xf32>
    %27 = vector.broadcast %cst_20 : f32 to vector<1x160xf32>
    %28 = arith.select %25, %26, %27 : vector<1x160xi1>, vector<1x160xf32>
    %29 = vector.broadcast %18 : f32 to vector<1x160xf32>
    %30 = arith.select %23, %29, %28 : vector<1x160xi1>, vector<1x160xf32>
    %31 = vector.broadcast %30 : vector<1x160xf32> to vector<4x160xf32>
    %32 = arith.mulf %16, %31 : vector<4x160xf32>
    %cst_21 = arith.constant 0.000000e+00 : f32
    %33 = vector.broadcast %cst_21 : f32 to vector<4x1xf32>
    %34 = tpu.concatenate %33, %32, %33 in 1 : vector<4x1xf32>, vector<4x160xf32>, vector<4x1xf32> -> vector<4x162xf32>
    %35 = tpu.iota {dimensions = array<i32: 1>} : vector<1x128xi32>
    %c16_i32_22 = arith.constant 16 : i32
    %c0_i32_23 = arith.constant 0 : i32
    %36 = arith.cmpi eq, %c16_i32_22, %c0_i32_23 : i32
    %c1_i32_24 = arith.constant 1 : i32
    %37 = arith.select %36, %c1_i32_24, %c16_i32_22 : i32
    %38 = vector.broadcast %37 : i32 to vector<1x128xi32>
    %39 = arith.remsi %35, %38 : vector<1x128xi32>
    %c0_i32_25 = arith.constant 0 : i32
    %40 = vector.broadcast %c0_i32_25 : i32 to vector<1x128xi32>
    %41 = arith.cmpi ne, %39, %40 : vector<1x128xi32>
    %c0_i32_26 = arith.constant 0 : i32
    %42 = vector.broadcast %c0_i32_26 : i32 to vector<1x128xi32>
    %43 = arith.cmpi slt, %39, %42 : vector<1x128xi32>
    %c0_i32_27 = arith.constant 0 : i32
    %44 = arith.cmpi slt, %37, %c0_i32_27 : i32
    %45 = vector.broadcast %44 : i1 to vector<1x128xi1>
    %46 = vector.broadcast %45 : vector<1x128xi1> to vector<1x128xi1>
    %47 = arith.xori %43, %46 : vector<1x128xi1>
    %48 = arith.andi %47, %41 : vector<1x128xi1>
    %49 = vector.broadcast %37 : i32 to vector<1x128xi32>
    %50 = arith.addi %39, %49 : vector<1x128xi32>
    %51 = arith.select %48, %50, %39 : vector<1x128xi1>, vector<1x128xi32>
    %c0_i32_28 = arith.constant 0 : i32
    %52 = vector.broadcast %c0_i32_28 : i32 to vector<1x128xi32>
    %53 = arith.cmpi ne, %51, %52 : vector<1x128xi32>
    %c15_i32 = arith.constant 15 : i32
    %54 = vector.broadcast %c15_i32 : i32 to vector<1x128xi32>
    %55 = arith.cmpi ne, %51, %54 : vector<1x128xi32>
    %56 = vector.extract_strided_slice %34 {offsets = [0, 0], sizes = [4, 128], strides = [1, 1]} : vector<4x162xf32> to vector<4x128xf32>
    %c0_i32_29 = arith.constant 0 : i32
    %57 = arith.sitofp %c0_i32_29 : i32 to f32
    %58 = vector.shape_cast %53 : vector<1x128xi1> to vector<1x128xi1>
    %59 = vector.broadcast %58 : vector<1x128xi1> to vector<4x128xi1>
    %60 = vector.broadcast %57 : f32 to vector<4x128xf32>
    %61 = arith.select %59, %56, %60 : vector<4x128xi1>, vector<4x128xf32>
    %62 = vector.extract_strided_slice %34 {offsets = [0, 1], sizes = [4, 128], strides = [1, 1]} : vector<4x162xf32> to vector<4x128xf32>
    %63 = vector.extract_strided_slice %34 {offsets = [0, 2], sizes = [4, 128], strides = [1, 1]} : vector<4x162xf32> to vector<4x128xf32>
    %c0_i32_30 = arith.constant 0 : i32
    %64 = arith.sitofp %c0_i32_30 : i32 to f32
    %65 = vector.shape_cast %55 : vector<1x128xi1> to vector<1x128xi1>
    %66 = vector.broadcast %65 : vector<1x128xi1> to vector<4x128xi1>
    %67 = vector.broadcast %64 : f32 to vector<4x128xf32>
    %68 = arith.select %66, %63, %67 : vector<4x128xi1>, vector<4x128xf32>
    %69 = vector.extract_strided_slice %34 {offsets = [0, 16], sizes = [4, 128], strides = [1, 1]} : vector<4x162xf32> to vector<4x128xf32>
    %c0_i32_31 = arith.constant 0 : i32
    %70 = arith.sitofp %c0_i32_31 : i32 to f32
    %71 = vector.shape_cast %53 : vector<1x128xi1> to vector<1x128xi1>
    %72 = vector.broadcast %71 : vector<1x128xi1> to vector<4x128xi1>
    %73 = vector.broadcast %70 : f32 to vector<4x128xf32>
    %74 = arith.select %72, %69, %73 : vector<4x128xi1>, vector<4x128xf32>
    %75 = vector.extract_strided_slice %34 {offsets = [0, 17], sizes = [4, 128], strides = [1, 1]} : vector<4x162xf32> to vector<4x128xf32>
    %76 = vector.extract_strided_slice %34 {offsets = [0, 18], sizes = [4, 128], strides = [1, 1]} : vector<4x162xf32> to vector<4x128xf32>
    %c0_i32_32 = arith.constant 0 : i32
    %77 = arith.sitofp %c0_i32_32 : i32 to f32
    %78 = vector.shape_cast %55 : vector<1x128xi1> to vector<1x128xi1>
    %79 = vector.broadcast %78 : vector<1x128xi1> to vector<4x128xi1>
    %80 = vector.broadcast %77 : f32 to vector<4x128xf32>
    %81 = arith.select %79, %76, %80 : vector<4x128xi1>, vector<4x128xf32>
    %82 = vector.extract_strided_slice %34 {offsets = [0, 32], sizes = [4, 128], strides = [1, 1]} : vector<4x162xf32> to vector<4x128xf32>
    %c0_i32_33 = arith.constant 0 : i32
    %83 = arith.sitofp %c0_i32_33 : i32 to f32
    %84 = vector.shape_cast %53 : vector<1x128xi1> to vector<1x128xi1>
    %85 = vector.broadcast %84 : vector<1x128xi1> to vector<4x128xi1>
    %86 = vector.broadcast %83 : f32 to vector<4x128xf32>
    %87 = arith.select %85, %82, %86 : vector<4x128xi1>, vector<4x128xf32>
    %88 = vector.extract_strided_slice %34 {offsets = [0, 33], sizes = [4, 128], strides = [1, 1]} : vector<4x162xf32> to vector<4x128xf32>
    %89 = vector.extract_strided_slice %34 {offsets = [0, 34], sizes = [4, 128], strides = [1, 1]} : vector<4x162xf32> to vector<4x128xf32>
    %c0_i32_34 = arith.constant 0 : i32
    %90 = arith.sitofp %c0_i32_34 : i32 to f32
    %91 = vector.shape_cast %55 : vector<1x128xi1> to vector<1x128xi1>
    %92 = vector.broadcast %91 : vector<1x128xi1> to vector<4x128xi1>
    %93 = vector.broadcast %90 : f32 to vector<4x128xf32>
    %94 = arith.select %92, %89, %93 : vector<4x128xi1>, vector<4x128xf32>
    %95 = tpu.concatenate %61, %62, %68, %74, %75, %81, %87, %88, %94 in 0 : vector<4x128xf32>, vector<4x128xf32>, vector<4x128xf32>, vector<4x128xf32>, vector<4x128xf32>, vector<4x128xf32>, vector<4x128xf32>, vector<4x128xf32>, vector<4x128xf32> -> vector<36x128xf32>
    %c0_35 = arith.constant 0 : index
    %c0_36 = arith.constant 0 : index
    %96 = vector.load %arg7[%c0_35, %c0_36] : memref<4x36xf32, #tpu.memory_space<vmem>>, vector<4x36xf32>
    %cst_37 = arith.constant dense<0.000000e+00> : vector<4x128xf32>
    %97 = tpu.matmul %96, %95, %cst_37 {dimension_numbers = #tpu.dot_dimension_numbers<[1], [0], [0], [1], [0, 0, 1, 1], [], []>} : vector<4x36xf32>, vector<36x128xf32>, vector<4x128xf32> -> vector<4x128xf32>
    %c0_38 = arith.constant 0 : index
    %c0_39 = arith.constant 0 : index
    %98 = vector.load %arg8[%c0_38, %c0_39] : memref<4x1xf32, #tpu.memory_space<vmem>>, vector<4x1xf32>
    %99 = vector.broadcast %98 : vector<4x1xf32> to vector<4x128xf32>
    %100 = arith.addf %97, %99 : vector<4x128xf32>
    %101 = arith.addf %1, %100 : vector<4x128xf32>
    %cst_40 = arith.constant 0.000000e+00 : f32
    %102 = vector.broadcast %cst_40 : f32 to vector<4x128xf32>
    %103 = arith.cmpf ogt, %101, %102 : vector<4x128xf32>
    %cst_41 = arith.constant 1.000000e-01 : f32
    %104 = vector.broadcast %cst_41 : f32 to vector<4x128xf32>
    %105 = arith.mulf %104, %101 : vector<4x128xf32>
    %106 = arith.select %103, %101, %105 : vector<4x128xi1>, vector<4x128xf32>
    %107 = vector.shape_cast %106 : vector<4x128xf32> to vector<1x4x128xf32>
    %c0_42 = arith.constant 0 : index
    %c0_43 = arith.constant 0 : index
    %c0_44 = arith.constant 0 : index
    %108 = vector.load %arg9[%c0_42, %c0_43, %c0_44] : memref<1x4x128xf32, #tpu.memory_space<vmem>>, vector<1x4x128xf32>
    tpu.vector_store %arg9[%c0_42, %c0_43, %c0_44], %107 {strides = array<i32>} : memref<1x4x128xf32, #tpu.memory_space<vmem>>, vector<1x4x128xf32>,
    return
  }
  func.func @transform_0(%arg0: i32, %arg1: i32) -> (i32, i32, i32) {
    %c0_i32 = arith.constant 0 : i32
    %c0_i32_0 = arith.constant 0 : i32
    return %arg0, %c0_i32, %arg1 : i32, i32, i32
  }
  func.func @transform_1(%arg0: i32, %arg1: i32) -> (i32, i32, i32, i32) {
    %c0_i32 = arith.constant 0 : i32
    %c0_i32_0 = arith.constant 0 : i32
    %c0_i32_1 = arith.constant 0 : i32
    return %arg0, %arg1, %c0_i32, %c0_i32_0 : i32, i32, i32, i32
  }
  func.func @transform_2(%arg0: i32, %arg1: i32) -> (i32, i32, i32, i32) {
    %c0_i32 = arith.constant 0 : i32
    %c0_i32_0 = arith.constant 0 : i32
    %c0_i32_1 = arith.constant 0 : i32
    return %arg0, %arg1, %c0_i32, %c0_i32_0 : i32, i32, i32, i32
  }
  func.func @transform_3(%arg0: i32, %arg1: i32) -> (i32, i32) {
    %c0_i32 = arith.constant 0 : i32
    %c0_i32_0 = arith.constant 0 : i32
    %c0_i32_1 = arith.constant 0 : i32
    return %c0_i32, %c0_i32_0 : i32, i32
  }
  func.func @transform_4(%arg0: i32, %arg1: i32) -> (i32, i32) {
    %c0_i32 = arith.constant 0 : i32
    %c0_i32_0 = arith.constant 0 : i32
    %c0_i32_1 = arith.constant 0 : i32
    return %c0_i32, %c0_i32_0 : i32, i32
  }
  func.func @transform_5(%arg0: i32, %arg1: i32) -> (i32, i32) {
    %c0_i32 = arith.constant 0 : i32
    %c0_i32_0 = arith.constant 0 : i32
    %c0_i32_1 = arith.constant 0 : i32
    return %c0_i32, %c0_i32_0 : i32, i32
  }
  func.func @transform_6(%arg0: i32, %arg1: i32) -> (i32, i32) {
    %c0_i32 = arith.constant 0 : i32
    %c0_i32_0 = arith.constant 0 : i32
    %c0_i32_1 = arith.constant 0 : i32
    return %c0_i32, %c0_i32_0 : i32, i32
  }
  func.func @transform_7(%arg0: i32, %arg1: i32) -> (i32, i32, i32) {
    %c0_i32 = arith.constant 0 : i32
    %c0_i32_0 = arith.constant 0 : i32
    return %arg0, %c0_i32, %arg1 : i32, i32, i32
  }
}

</mosaic_0001>

<llo_original>
// kernel: tpu_custom_call.1
$region0: #{tpu_custom_call.1}
  #allocation0 [shape = 'u32[]', space=smem, size = 0x4, offset = 0x4, fixed_abs, tag = 'smem constant byte address 0x4 - core index']
  #allocation1 [shape = 'u32[72,128]{1,0:T(1,128)}', space=vmem, size = 0x9000, scoped, tag = 'internal scratch']
  %s0 = inlined_call_operand.hbm [shape: f32[2,4,256], index: 0, kind: input, shape index: {}]
  %s1 = inlined_call_operand.hbm [shape: f32[2,2,4,16], index: 1, kind: input, shape index: {}]
  %s2 = inlined_call_operand.hbm [shape: f32[2,2,4,16], index: 2, kind: input, shape index: {}]
  %s3 = inlined_call_operand.vmem [shape: f32[4,4], index: 3, kind: input, shape index: {}]
  %s4 = inlined_call_operand.vmem [shape: f32[4,1], index: 4, kind: input, shape index: {}]
  %s5 = inlined_call_operand.vmem [shape: f32[4,36], index: 5, kind: input, shape index: {}]
  %s6 = inlined_call_operand.vmem [shape: f32[4,1], index: 6, kind: input, shape index: {}]
  %s7 = inlined_call_operand.hbm [shape: f32[2,4,256], index: 7, kind: output, shape index: {}]
  %s8 = sld [smem:[#allocation0]]
  $region73: #{tpu_custom_call.1} parent=0
    _
  %s10 = ssub.s32 1, %s8
  %s11 = scalar_select 0, %s10, %s8
  $region1: #{tpu_custom_call.1} parent=0
    #allocation2 [shape = 'u8[4096]{0}', space=vmem, size = 0x1000, scoped, tag = 'input window, operand 0']
    #allocation3 [shape = 's32[2]{0}', space=sflag, size = 0x8, scoped, tag = 'scoped memory for tpu_custom_call.1']
    #allocation4 [shape = 's32[2]{0}', space=sflag, size = 0x8, scoped, tag = 'scoped memory for tpu_custom_call.1']
    #allocation5 [shape = 'u8[4096]{0}', space=vmem, size = 0x1000, scoped, tag = 'input window, operand 1']
    #allocation6 [shape = 's32[2]{0}', space=sflag, size = 0x8, scoped, tag = 'scoped memory for tpu_custom_call.1']
    #allocation7 [shape = 'u8[4096]{0}', space=vmem, size = 0x1000, scoped, tag = 'input window, operand 2']
    #allocation8 [shape = 'u8[4096]{0}', space=vmem, size = 0x1000, scoped, tag = 'output window, operand 0']
    %12 = vsyncpa [#allocation3], 0
    %s13 = scalar_lea.sflag [#allocation3], 1
    %14 = vsyncpa %s13, 0
    %15 = vsyncpa [#allocation6], 0
    %s16 = scalar_lea.sflag [#allocation6], 1
    %17 = vsyncpa %s16, 0
    %18 = vsyncpa [#allocation4], 0
    %s19 = scalar_lea.sflag [#allocation4], 1
    %20 = vsyncpa %s19, 0
    loop: start=0, step=1, limit=6
    $region2: #{tpu_custom_call.1} parent=1 // loop_pre_header
      _
    $region3: #{tpu_custom_call.1} parent=1 // loop_header
      %s22 = sphi 0, %s26
      %p23 = scmp.ge.s32.totalorder %s22, 6
      %s29 = sphi 0, %s41
      %s30 = sphi 0, %s37
      %s31 = sphi 0, %s29
      %s32 = sphi 0, %s30
      %s33 = sphi 0, %s31
      %s34 = sphi 0, %s32
      %s46 = sphi 0, %s48
      %s49 = sphi 0, %s46
      %s50 = sphi 0, %s49
      %s66 = sphi 0, %s50
      %s74 = sphi 0, %s76
      %s77 = sphi 0, %s74
      %s78 = sphi 0, %s77
      %s94 = sphi 0, %s78
      %s102 = sphi 0, %s104
      %s105 = sphi 0, %s102
      %s106 = sphi 0, %s105
      %s122 = sphi 0, %s106
      %s126 = sphi 0, %s126
      %s128 = sphi 0, %s126
      %s129 = sphi 0, %s128
      %s143 = sphi 0, %s129
      %s147 = sphi 0, %s147
      %s149 = sphi 0, %s147
      %s150 = sphi 0, %s149
      %s164 = sphi 0, %s150
      %s168 = sphi 0, %s168
      %s170 = sphi 0, %s168
      %s171 = sphi 0, %s170
      %s185 = sphi 0, %s171
      %s189 = sphi 0, %s189
      %s191 = sphi 0, %s189
      %s192 = sphi 0, %s191
      %s206 = sphi 0, %s192
      %s214 = sphi 0, %s216
      %s217 = sphi 0, %s214
      %s218 = sphi 0, %s217
      %s234 = sphi 0, %s218
    $region4: #{tpu_custom_call.1} parent=1 // loop_header_branch
      %25 = sbr.rel (%p23) target = $region8
    $region5: #{tpu_custom_call.1} parent=1 // loop_body
      %s27 = ssub.s32 %s22, 1
      %s28 = ssub.s32 %s22, 2
      %s35 = sadd.s32 1, %s30
      %p36 = scmp.ge.s32.totalorder %s35, 2
      %s37 = scalar_select %p36, 0, %s35
      %s38 = sadd.s32 1, %s29
      %s39 = scalar_select %p36, %s38, %s29
      %p40 = scmp.ge.s32.totalorder %s39, 2
      %s41 = scalar_select %p40, 0, %s39
      %s42 = ssub.s32 %s29, %s41
      %s43 = ssub.s32 %s30, %s37
      %s44 = sor.u32 %s42, %s43
      %p45 = scmp.eq.s32.totalorder %s44, 0
      %s47 = sadd.s32 %s46, 1
      %s48 = scalar_select %p45, %s46, %s47
      %p51 = pneg %p45
      %p52 = scmp.eq.s32.totalorder %s22, 3
      %p53 = por %p51, %p52
      %p54 = scmp.ne.s32.totalorder %s46, %s49
      %p55 = scmp.eq.s32.totalorder %s22, 0
      %p56 = por %p54, %p55
      %p57 = scmp.ne.s32.totalorder %s46, %s49
      %p58 = scmp.eq.s32.totalorder %s27, 3
      %p59 = por %p57, %p58
      %p60 = scmp.ne.s32.totalorder %s49, %s50
      %p61 = scmp.eq.s32.totalorder %s27, 0
      %p62 = por %p60, %p61
      %p63 = scmp.ne.s32.totalorder %s49, %s50
      %p64 = scmp.eq.s32.totalorder %s28, 3
      %p65 = por %p63, %p64
      %p67 = scmp.ne.s32.totalorder %s50, %s66
      %p68 = scmp.eq.s32.totalorder %s28, 0
      %p69 = por %p67, %p68
      %s70 = ssub.s32 %s29, %s41
      %s71 = ssub.s32 %s30, %s37
      %s72 = sor.u32 %s70, %s71
      %p73 = scmp.eq.s32.totalorder %s72, 0
      %s75 = sadd.s32 %s74, 1
      %s76 = scalar_select %p73, %s74, %s75
      %p79 = pneg %p73
      %p80 = scmp.eq.s32.totalorder %s22, 3
      %p81 = por %p79, %p80
      %p82 = scmp.ne.s32.totalorder %s74, %s77
      %p83 = scmp.eq.s32.totalorder %s22, 0
      %p84 = por %p82, %p83
      %p85 = scmp.ne.s32.totalorder %s74, %s77
      %p86 = scmp.eq.s32.totalorder %s27, 3
      %p87 = por %p85, %p86
      %p88 = scmp.ne.s32.totalorder %s77, %s78
      %p89 = scmp.eq.s32.totalorder %s27, 0
      %p90 = por %p88, %p89
      %p91 = scmp.ne.s32.totalorder %s77, %s78
      %p92 = scmp.eq.s32.totalorder %s28, 3
      %p93 = por %p91, %p92
      %p95 = scmp.ne.s32.totalorder %s78, %s94
      %p96 = scmp.eq.s32.totalorder %s28, 0
      %p97 = por %p95, %p96
      %s98 = ssub.s32 %s29, %s41
      %s99 = ssub.s32 %s30, %s37
      %s100 = sor.u32 %s98, %s99
      %p101 = scmp.eq.s32.totalorder %s100, 0
      %s103 = sadd.s32 %s102, 1
      %s104 = scalar_select %p101, %s102, %s103
      %p107 = pneg %p101
      %p108 = scmp.eq.s32.totalorder %s22, 3
      %p109 = por %p107, %p108
      %p110 = scmp.ne.s32.totalorder %s102, %s105
      %p111 = scmp.eq.s32.totalorder %s22, 0
      %p112 = por %p110, %p111
      %p113 = scmp.ne.s32.totalorder %s102, %s105
      %p114 = scmp.eq.s32.totalorder %s27, 3
      %p115 = por %p113, %p114
      %p116 = scmp.ne.s32.totalorder %s105, %s106
      %p117 = scmp.eq.s32.totalorder %s27, 0
      %p118 = por %p116, %p117
      %p119 = scmp.ne.s32.totalorder %s105, %s106
      %p120 = scmp.eq.s32.totalorder %s28, 3
      %p121 = por %p119, %p120
      %p123 = scmp.ne.s32.totalorder %s106, %s122
      %p124 = scmp.eq.s32.totalorder %s28, 0
      %p125 = por %p123, %p124
      %s127 = sadd.s32 %s126, 1
      %p130 = scmp.eq.s32.totalorder %s22, 3
      %p131 = scmp.ne.s32.totalorder %s126, %s128
      %p132 = scmp.eq.s32.totalorder %s22, 0
      %p133 = por %p131, %p132
      %p134 = scmp.ne.s32.totalorder %s126, %s128
      %p135 = scmp.eq.s32.totalorder %s27, 3
      %p136 = por %p134, %p135
      %p137 = scmp.ne.s32.totalorder %s128, %s129
      %p138 = scmp.eq.s32.totalorder %s27, 0
      %p139 = por %p137, %p138
      %p140 = scmp.ne.s32.totalorder %s128, %s129
      %p141 = scmp.eq.s32.totalorder %s28, 3
      %p142 = por %p140, %p141
      %p144 = scmp.ne.s32.totalorder %s129, %s143
      %p145 = scmp.eq.s32.totalorder %s28, 0
      %p146 = por %p144, %p145
      %s148 = sadd.s32 %s147, 1
      %p151 = scmp.eq.s32.totalorder %s22, 3
      %p152 = scmp.ne.s32.totalorder %s147, %s149
      %p153 = scmp.eq.s32.totalorder %s22, 0
      %p154 = por %p152, %p153
      %p155 = scmp.ne.s32.totalorder %s147, %s149
      %p156 = scmp.eq.s32.totalorder %s27, 3
      %p157 = por %p155, %p156
      %p158 = scmp.ne.s32.totalorder %s149, %s150
      %p159 = scmp.eq.s32.totalorder %s27, 0
      %p160 = por %p158, %p159
      %p161 = scmp.ne.s32.totalorder %s149, %s150
      %p162 = scmp.eq.s32.totalorder %s28, 3
      %p163 = por %p161, %p162
      %p165 = scmp.ne.s32.totalorder %s150, %s164
      %p166 = scmp.eq.s32.totalorder %s28, 0
      %p167 = por %p165, %p166
      %s169 = sadd.s32 %s168, 1
      %p172 = scmp.eq.s32.totalorder %s22, 3
      %p173 = scmp.ne.s32.totalorder %s168, %s170
      %p174 = scmp.eq.s32.totalorder %s22, 0
      %p175 = por %p173, %p174
      %p176 = scmp.ne.s32.totalorder %s168, %s170
      %p177 = scmp.eq.s32.totalorder %s27, 3
      %p178 = por %p176, %p177
      %p179 = scmp.ne.s32.totalorder %s170, %s171
      %p180 = scmp.eq.s32.totalorder %s27, 0
      %p181 = por %p179, %p180
      %p182 = scmp.ne.s32.totalorder %s170, %s171
      %p183 = scmp.eq.s32.totalorder %s28, 3
      %p184 = por %p182, %p183
      %p186 = scmp.ne.s32.totalorder %s171, %s185
      %p187 = scmp.eq.s32.totalorder %s28, 0
      %p188 = por %p186, %p187
      %s190 = sadd.s32 %s189, 1
      %p193 = scmp.eq.s32.totalorder %s22, 3
      %p194 = scmp.ne.s32.totalorder %s189, %s191
      %p195 = scmp.eq.s32.totalorder %s22, 0
      %p196 = por %p194, %p195
      %p197 = scmp.ne.s32.totalorder %s189, %s191
      %p198 = scmp.eq.s32.totalorder %s27, 3
      %p199 = por %p197, %p198
      %p200 = scmp.ne.s32.totalorder %s191, %s192
      %p201 = scmp.eq.s32.totalorder %s27, 0
      %p202 = por %p200, %p201
      %p203 = scmp.ne.s32.totalorder %s191, %s192
      %p204 = scmp.eq.s32.totalorder %s28, 3
      %p205 = por %p203, %p204
      %p207 = scmp.ne.s32.totalorder %s192, %s206
      %p208 = scmp.eq.s32.totalorder %s28, 0
      %p209 = por %p207, %p208
      %s210 = ssub.s32 %s29, %s41
      %s211 = ssub.s32 %s30, %s37
      %s212 = sor.u32 %s210, %s211
      %p213 = scmp.eq.s32.totalorder %s212, 0
      %s215 = sadd.s32 %s214, 1
      %s216 = scalar_select %p213, %s214, %s215
      %p219 = pneg %p213
      %p220 = scmp.eq.s32.totalorder %s22, 3
      %p221 = por %p219, %p220
      %p222 = scmp.ne.s32.totalorder %s214, %s217
      %p223 = scmp.eq.s32.totalorder %s22, 0
      %p224 = por %p222, %p223
      %p225 = scmp.ne.s32.totalorder %s214, %s217
      %p226 = scmp.eq.s32.totalorder %s27, 3
      %p227 = por %p225, %p226
      %p228 = scmp.ne.s32.totalorder %s217, %s218
      %p229 = scmp.eq.s32.totalorder %s27, 0
      %p230 = por %p228, %p229
      %p231 = scmp.ne.s32.totalorder %s217, %s218
      %p232 = scmp.eq.s32.totalorder %s28, 3
      %p233 = por %p231, %p232
      %p235 = scmp.ne.s32.totalorder %s218, %s234
      %p236 = scmp.eq.s32.totalorder %s28, 0
      %p237 = por %p235, %p236
      %p238 = scmp.le.s32.totalorder 1, %s22
      %p239 = scmp.lt.s32.totalorder %s22, 5
      %p240 = pnand %p238, %p239
      %p241 = pneg %p240
      // Predicated region
      $region9: #{tpu_custom_call.1} parent=5 // pred_check
        _
      $region10: #{tpu_custom_call.1} parent=5 // pred_check_branch
        %243 = sbr.rel (%p240) target = $region12
      $region11: #{tpu_custom_call.1} parent=5 // pred_region
        %s244 = ssub.s32 %s22, 1
        // Predicated region
        $region13: #{tpu_custom_call.1} parent=11 // pred_check
          %p245 = pneg %p139
        $region14: #{tpu_custom_call.1} parent=11 // pred_check_branch
          %247 = sbr.rel (%p245) target = $region16
        $region15: #{tpu_custom_call.1} parent=11 // pred_region
          _
        $region16: #{tpu_custom_call.1} parent=11 // pred_fallthru
          _
        // Predicated region
        $region17: #{tpu_custom_call.1} parent=11 // pred_check
          %p248 = pneg %p160
        $region18: #{tpu_custom_call.1} parent=11 // pred_check_branch
          %250 = sbr.rel (%p248) target = $region20
        $region19: #{tpu_custom_call.1} parent=11 // pred_region
          _
        $region20: #{tpu_custom_call.1} parent=11 // pred_fallthru
          _
        // Predicated region
        $region21: #{tpu_custom_call.1} parent=11 // pred_check
          %p251 = pneg %p181
        $region22: #{tpu_custom_call.1} parent=11 // pred_check_branch
          %253 = sbr.rel (%p251) target = $region24
        $region23: #{tpu_custom_call.1} parent=11 // pred_region
          _
        $region24: #{tpu_custom_call.1} parent=11 // pred_fallthru
          _
        // Predicated region
        $region25: #{tpu_custom_call.1} parent=11 // pred_check
          %p254 = pneg %p202
        $region26: #{tpu_custom_call.1} parent=11 // pred_check_branch
          %256 = sbr.rel (%p254) target = $region28
        $region27: #{tpu_custom_call.1} parent=11 // pred_region
          _
        $region28: #{tpu_custom_call.1} parent=11 // pred_fallthru
          _
      $region12: #{tpu_custom_call.1} parent=5 // pred_fallthru
        _
      %p257 = scmp.lt.s32.totalorder %s22, 4
      // Predicated region
      $region29: #{tpu_custom_call.1} parent=5 // pred_check
        %p258 = pneg %p257
      $region30: #{tpu_custom_call.1} parent=5 // pred_check_branch
        %260 = sbr.rel (%p258) target = $region32
      $region31: #{tpu_custom_call.1} parent=5 // pred_region
        // Predicated region
        $region33: #{tpu_custom_call.1} parent=31 // pred_check
          %p261 = pneg %p56
        $region34: #{tpu_custom_call.1} parent=31 // pred_check_branch
          %263 = sbr.rel (%p261) target = $region36
        $region35: #{tpu_custom_call.1} parent=31 // pred_region
          %s264 = sand.u32 %s46, 1
          %s265 = scalar_lea.sflag [#allocation3], %s264
          %s266 = sand.u32 %s46, 1
          %s267 = smul.addr %s266, 4
          %s268 = scalar_lea.vmem [#allocation2], %s267
          %270 = vsyncadd %s265, 0
          %s271 = smul.addr %s29, 2
          %s272 = sadd.s32 %s30, %s271
          %s273 = smul.addr %s272, 4
          %s274 = scalar_lea.hbm %s0, %s273
          %s276 = sshll.u32 %s274, 4
          %s277 = int_to_ptr.hbm [resolvable:$true] %s276
          %s278 = sshll.u32 %s268, 4
          %s279 = int_to_ptr.vmem [resolvable:$true] %s278
          %281 = dma.hbm_to_vmem [thread:$0]  %s277, 64, %s279, %s265
        $region36: #{tpu_custom_call.1} parent=31 // pred_fallthru
          _
        // Predicated region
        $region37: #{tpu_custom_call.1} parent=31 // pred_check
          %p282 = pneg %p84
        $region38: #{tpu_custom_call.1} parent=31 // pred_check_branch
          %284 = sbr.rel (%p282) target = $region40
        $region39: #{tpu_custom_call.1} parent=31 // pred_region
          %s285 = sand.u32 %s22, 1
          %s286 = scalar_lea.sflag [#allocation6], %s285
          %s287 = sand.u32 %s74, 1
          %s288 = smul.addr %s287, 4
          %s289 = scalar_lea.vmem [#allocation5], %s288
          %291 = vsyncadd %s286, 0
          %s292 = smul.addr %s29, 2
          %s293 = sadd.s32 %s30, %s292
          %s294 = smul.addr %s293, 4
          %s295 = scalar_lea.hbm %s1, %s294
          %s297 = sshll.u32 %s295, 4
          %s298 = int_to_ptr.hbm [resolvable:$true] %s297
          %s299 = sshll.u32 %s289, 4
          %s300 = int_to_ptr.vmem [resolvable:$true] %s299
          %302 = dma.hbm_to_vmem [thread:$0]  %s298, 64, %s300, %s286
        $region40: #{tpu_custom_call.1} parent=31 // pred_fallthru
          _
        // Predicated region
        $region41: #{tpu_custom_call.1} parent=31 // pred_check
          %p303 = pneg %p112
        $region42: #{tpu_custom_call.1} parent=31 // pred_check_branch
          %305 = sbr.rel (%p303) target = $region44
        $region43: #{tpu_custom_call.1} parent=31 // pred_region
          %s306 = sand.u32 %s22, 1
          %s307 = scalar_lea.sflag [#allocation6], %s306
          %s308 = sand.u32 %s102, 1
          %s309 = smul.addr %s308, 4
          %s310 = scalar_lea.vmem [#allocation7], %s309
          %312 = vsyncadd %s307, 0
          %s313 = smul.addr %s29, 2
          %s314 = sadd.s32 %s30, %s313
          %s315 = smul.addr %s314, 4
          %s316 = scalar_lea.hbm %s2, %s315
          %s318 = sshll.u32 %s316, 4
          %s319 = int_to_ptr.hbm [resolvable:$true] %s318
          %s320 = sshll.u32 %s310, 4
          %s321 = int_to_ptr.vmem [resolvable:$true] %s320
          %323 = dma.hbm_to_vmem [thread:$0]  %s319, 64, %s321, %s307
        $region44: #{tpu_custom_call.1} parent=31 // pred_fallthru
          _
      $region32: #{tpu_custom_call.1} parent=5 // pred_fallthru
        _
      %p324 = scmp.le.s32.totalorder 1, %s22
      %p325 = scmp.lt.s32.totalorder %s22, 5
      %p326 = pnand %p324, %p325
      %p327 = pneg %p326
      // Predicated region
      $region45: #{tpu_custom_call.1} parent=5 // pred_check
        _
      $region46: #{tpu_custom_call.1} parent=5 // pred_check_branch
        %329 = sbr.rel (%p326) target = $region48
      $region47: #{tpu_custom_call.1} parent=5 // pred_region
        %s330 = ssub.s32 %s22, 1
        %s331 = sand.u32 %s49, 1
        %s332 = scalar_lea.sflag [#allocation3], %s331
        %s333 = sand.u32 %s49, 1
        %s334 = smul.addr %s333, 4
        %s335 = scalar_lea.vmem [#allocation2], %s334
        // Predicated region
        $region49: #{tpu_custom_call.1} parent=47 // pred_check
          %p336 = pneg %p62
        $region50: #{tpu_custom_call.1} parent=47 // pred_check_branch
          %338 = sbr.rel (%p336) target = $region52
        $region51: #{tpu_custom_call.1} parent=47 // pred_region
          %340 = dma.done %s332, 64
        $region52: #{tpu_custom_call.1} parent=47 // pred_fallthru
          _
        %s341 = sand.u32 %s27, 1
        %s342 = scalar_lea.sflag [#allocation6], %s341
        %s343 = sand.u32 %s77, 1
        %s344 = smul.addr %s343, 4
        %s345 = scalar_lea.vmem [#allocation5], %s344
        // Predicated region
        $region53: #{tpu_custom_call.1} parent=47 // pred_check
          %p346 = pneg %p90
        $region54: #{tpu_custom_call.1} parent=47 // pred_check_branch
          %348 = sbr.rel (%p346) target = $region56
        $region55: #{tpu_custom_call.1} parent=47 // pred_region
          %350 = dma.done %s342, 64
        $region56: #{tpu_custom_call.1} parent=47 // pred_fallthru
          _
        %s351 = sand.u32 %s27, 1
        %s352 = scalar_lea.sflag [#allocation6], %s351
        %s353 = sand.u32 %s105, 1
        %s354 = smul.addr %s353, 4
        %s355 = scalar_lea.vmem [#allocation7], %s354
        // Predicated region
        $region57: #{tpu_custom_call.1} parent=47 // pred_check
          %p356 = pneg %p118
        $region58: #{tpu_custom_call.1} parent=47 // pred_check_branch
          %358 = sbr.rel (%p356) target = $region60
        $region59: #{tpu_custom_call.1} parent=47 // pred_region
          %360 = dma.done %s352, 64
        $region60: #{tpu_custom_call.1} parent=47 // pred_fallthru
          _
        %s361 = sand.u32 %s49, 1
        %s362 = scalar_lea.sflag [#allocation3], %s361
        %s363 = sand.u32 %s49, 1
        %s364 = smul.addr %s363, 4
        %s365 = scalar_lea.vmem [#allocation2], %s364
        %p366 = pneg %p62
        %p367 = pneg %p59
        %s368 = sand.u32 %s27, 1
        %s369 = scalar_lea.sflag [#allocation6], %s368
        %s370 = sand.u32 %s77, 1
        %s371 = smul.addr %s370, 4
        %s372 = scalar_lea.vmem [#allocation5], %s371
        %p373 = pneg %p90
        %p374 = pneg %p87
        %s375 = sand.u32 %s27, 1
        %s376 = scalar_lea.sflag [#allocation6], %s375
        %s377 = sand.u32 %s105, 1
        %s378 = smul.addr %s377, 4
        %s379 = scalar_lea.vmem [#allocation7], %s378
        %p380 = pneg %p118
        %p381 = pneg %p115
        %p382 = pneg %p139
        %p383 = pneg %p136
        %p384 = pneg %p160
        %p385 = pneg %p157
        %p386 = pneg %p181
        %p387 = pneg %p178
        %p388 = pneg %p202
        %p389 = pneg %p199
        %p390 = pneg %p230
        %p391 = pneg %p227
        %s392 = sand.u32 %s217, 1
        %s393 = scalar_lea.sflag [#allocation4], %s392
        %s394 = sand.u32 %s217, 1
        %s395 = smul.addr %s394, 4
        %s396 = scalar_lea.vmem [#allocation8], %s395
        %v397 = vld [vmem:[%s335] sm:$0xf]
        %v398 = vld [vmem:[%s345] sm:$0xf]
        %v399 = vld [vmem:[%s355] sm:$0xf]
        %401 = vrot.lane.b32.xlu0 %v397, 16
        %v402 = vpop.permute.xlu0 %401
        %405 = vrot.lane.b32.xlu0 %v399, 16
        %v406 = vpop.permute.xlu0 %405
        %vm408 = vcmask 130048
        %v409 = vsel %vm408, %v398, %v402
        %v410 = vsel %vm408, %v402, %v406
        %v411 = vld [vmem:[%s3] sm:$0xf]
        %v412 = vld [vmem:[%s4] sm:$0xf]
        %414 = vset.pattern.permute.xlu0 0
        %415 = vperm.xlu0 %414, %v412
        %v416 = vpop.permute.xlu0 %415
        %vm418 = vcmask 31744
        %v420 = vsel %vm418, %v411, 0
        %vm422 = vcmask 1043456
        %v424 = vsel %vm422, %v409, 0
        %v427 = vsel %vm422, %v410, 0
        %429 = vmatpush.msra.mxu0 0.0
        %430 = vmatpush.msra.mxu0 0.0
        %431 = vmatpush.msra.mxu0 0.0
        %432 = vmatpush.msra.mxu0 0.0
        %433 = vmatpush.msra.mxu0 0.0
        %434 = vmatpush.msra.mxu0 0.0
        %435 = vmatpush.msra.mxu0 0.0
        %436 = vmatpush.msra.mxu0 0.0
        %437 = vmatpush.msra.mxu0 0.0
        %438 = vmatpush.msra.mxu0 0.0
        %439 = vmatpush.msra.mxu0 0.0
        %440 = vmatpush.msra.mxu0 0.0
        %441 = vmatpush.msra.mxu0 0.0
        %442 = vmatpush.msra.mxu0 0.0
        %443 = vmatpush.msra.mxu0 0.0
        %444 = vmatpush.msra.mxu0 %v424
        %445 = vmatmul.f32.gmra.mxu0 %v420
        %v446 = vpop.f32.mrf.mxu0
        %v447 = vadd.f32 %v416, %v446
        %448 = vdwg.mxu0
        %449 = vmatpush.msra.mxu0 0.0
        %450 = vmatpush.msra.mxu0 0.0
        %451 = vmatpush.msra.mxu0 0.0
        %452 = vmatpush.msra.mxu0 0.0
        %453 = vmatpush.msra.mxu0 0.0
        %454 = vmatpush.msra.mxu0 0.0
        %455 = vmatpush.msra.mxu0 0.0
        %456 = vmatpush.msra.mxu0 0.0
        %457 = vmatpush.msra.mxu0 0.0
        %458 = vmatpush.msra.mxu0 0.0
        %459 = vmatpush.msra.mxu0 0.0
        %460 = vmatpush.msra.mxu0 0.0
        %461 = vmatpush.msra.mxu0 0.0
        %462 = vmatpush.msra.mxu0 0.0
        %463 = vmatpush.msra.mxu0 0.0
        %464 = vmatpush.msra.mxu0 %v427
        %465 = vmatmul.f32.gmra.mxu0 %v420
        %v466 = vpop.f32.mrf.mxu0
        %v467 = vadd.f32 %v416, %v466
        %468 = vdwg.mxu0
        %vm469 = vcmp.gt.f32.partialorder %v447, 0.0
        %vm470 = vcmp.gt.f32.partialorder %v467, 0.0
        %v471 = vmul.f32 %v447, 0.1
        %v472 = vmul.f32 %v467, 0.1
        %v473 = vsel %vm469, %v447, %v471
        %v474 = vsel %vm470, %v467, %v472
        %p475 = scmp.gt.s32.totalorder %s32, 0
        %s476 = scalar_select %p475, 1.0, 0.0
        %p477 = scmp.lt.s32.totalorder %s32, 1
        %s478 = scalar_select %p477, 1.0, 0.0
        %v479 = vlaneseq
        %v480 = vand.u32 %v479, 127
        %v481 = vadd.s32 %v480, 128
        %vm482 = vcmp.lt.s32.totalorder %v480, 16
        %vm483 = vcmp.lt.s32.totalorder %v481, 16
        %vm484 = vcmp.ge.s32.totalorder %v480, 144
        %vm485 = vcmp.ge.s32.totalorder %v481, 144
        %v486 = vstv %s478
        %v487 = vsel %vm484, %v486, 1.0
        %v488 = vsel %vm485, %v486, 1.0
        %v489 = vstv %s476
        %v490 = vsel %vm482, %v489, %v487
        %v491 = vsel %vm483, %v489, %v488
        %v492 = vmul.f32 %v473, %v490
        %v493 = vmul.f32 %v474, %v491
        %496 = vrot.lane.b32.xlu0 %v492, 1
        %v497 = vpop.permute.xlu0 %496
        %498 = vrot.lane.b32.xlu0 %v493, 1
        %v499 = vpop.permute.xlu0 %498
        %vm500 = vcmask 7168
        %v501 = vsel %vm500, %v497, %v499
        %v504 = vsel %vm500, 0.0, %v497
        %vm505 = vcmask 269312
        %v506 = vsel %vm505, %v501, 0.0
        %vm507 = vcmp.lt.s32.totalorder %v480, 0
        %v508 = vsub.s32 0, %v480
        %v509 = vsel %vm507, %v508, %v480
        %v510 = vshrl.u32 %v509, 4
        %v511 = vand.u32 %v509, 15
        %v512 = vsub.s32 0, %v511
        %v513 = vsel %vm507, %v512, %v511
        %vm514 = vcmp.ne.s32.totalorder %v513, 0
        %vm515 = vcmp.lt.s32.totalorder %v513, 0
        %vm516 = vmand %vm515, %vm514
        %v517 = vadd.s32 %v513, 16
        %v518 = vsel %vm516, %v517, %v513
        %vm519 = vcmp.ne.s32.totalorder %v518, 0
        %vm520 = vcmp.ne.s32.totalorder %v518, 15
        %v521 = vsel %vm519, 1, 0
        %vm522 = vcmp.eq.s32.totalorder %v521, 1
        %v523 = vsel %vm522, %v504, 0.0
        %v524 = vsel %vm520, 1, 0
        %vm525 = vcmp.eq.s32.totalorder %v524, 1
        %528 = vrot.lane.b32.xlu0 %v504, 126
        %v529 = vpop.permute.xlu0 %528
        %530 = vrot.lane.b32.xlu0 %v506, 126
        %v531 = vpop.permute.xlu0 %530
        %vm532 = vcmask 1031168
        %v533 = vsel %vm532, %v529, %v531
        %v535 = vsel %vm525, %v533, 0.0
        %536 = vrot.lane.b32.xlu0 %v504, 112
        %v537 = vpop.permute.xlu0 %536
        %538 = vrot.lane.b32.xlu0 %v506, 112
        %v539 = vpop.permute.xlu0 %538
        %vm540 = vcmask 916480
        %v541 = vsel %vm540, %v537, %v539
        %v543 = vsel %vm522, %v541, 0.0
        %544 = vrot.lane.b32.xlu0 %v504, 110
        %v545 = vpop.permute.xlu0 %544
        %546 = vrot.lane.b32.xlu0 %v506, 110
        %v547 = vpop.permute.xlu0 %546
        %vm548 = vcmask 900096
        %v549 = vsel %vm548, %v545, %v547
        %v551 = vsel %vm525, %v549, 0.0
        %552 = vrot.lane.b32.xlu0 %v504, 96
        %v553 = vpop.permute.xlu0 %552
        %554 = vrot.lane.b32.xlu0 %v506, 96
        %v555 = vpop.permute.xlu0 %554
        %vm556 = vcmask 785408
        %v557 = vsel %vm556, %v553, %v555
        %v559 = vsel %vm522, %v557, 0.0
        %560 = vrot.lane.b32.xlu0 %v504, 94
        %v561 = vpop.permute.xlu0 %560
        %562 = vrot.lane.b32.xlu0 %v506, 94
        %v563 = vpop.permute.xlu0 %562
        %vm564 = vcmask 769024
        %v565 = vsel %vm564, %v561, %v563
        %v567 = vsel %vm525, %v565, 0.0
        %v568 = vrot.slane %v504, 4
        %v569 = vrot.slane %v506, 4
        %570 = vrot.lane.b32.xlu0 %v568, 127
        %v571 = vpop.permute.xlu0 %570
        %572 = vrot.lane.b32.xlu0 %v569, 127
        %v573 = vpop.permute.xlu0 %572
        %vm574 = vcmask 1039360
        %v575 = vsel %vm574, %v571, %v573
        %v578 = vrot.slane %v543, 4
        %580 = vrot.lane.b32.xlu0 %v504, 111
        %v581 = vpop.permute.xlu0 %580
        %582 = vrot.lane.b32.xlu0 %v506, 111
        %v583 = vpop.permute.xlu0 %582
        %vm584 = vcmask 908288
        %v585 = vsel %vm584, %v581, %v583
        %v588 = vrot.slane %v551, 4
        %590 = vrot.lane.b32.xlu0 %v568, 95
        %v591 = vpop.permute.xlu0 %590
        %592 = vrot.lane.b32.xlu0 %v569, 95
        %v593 = vpop.permute.xlu0 %592
        %vm594 = vcmask 777216
        %v595 = vsel %vm594, %v591, %v593
        %v597 = vsel %vm422, %v523, %v575
        %v598 = vsel %vm422, %v535, %v578
        %v599 = vsel %vm422, %v585, %v588
        %v600 = vsel %vm422, %v559, %v595
        %v601 = vld [vmem:[%s5] sm:$0xf]
        %v602 = vld [vmem:[%s6] sm:$0xf]
        %604 = vset.pattern.permute.xlu0 0
        %605 = vperm.xlu0 %604, %v602
        %v606 = vpop.permute.xlu0 %605
        %vm608 = vcmask 293888
        %v610 = vsel %vm608, %v601, 0
        %v613 = vsel %vm422, %v567, 0
        %615 = vmatpush.msra.mxu0 0.0
        %616 = vmatpush.msra.mxu0 0.0
        %617 = vmatpush.msra.mxu0 0.0
        %618 = vmatpush.msra.mxu0 0.0
        %619 = vmatpush.msra.mxu0 0.0
        %620 = vmatpush.msra.mxu0 0.0
        %621 = vmatpush.msra.mxu0 0.0
        %622 = vmatpush.msra.mxu0 0.0
        %623 = vmatpush.msra.mxu0 0.0
        %624 = vmatpush.msra.mxu0 0.0
        %625 = vmatpush.msra.mxu0 0.0
        %626 = vmatpush.msra.mxu0 %v613
        %627 = vmatpush.msra.mxu0 %v600
        %628 = vmatpush.msra.mxu0 %v599
        %629 = vmatpush.msra.mxu0 %v598
        %630 = vmatpush.msra.mxu0 %v597
        %631 = vmatmul.f32.gmra.mxu0 %v610
        %v632 = vpop.f32.mrf.mxu0
        %v633 = vadd.f32 %v606, %v632
        %634 = vdwg.mxu0
        %v635 = vadd.f32 %v397, %v633
        %vm636 = vcmp.gt.f32.partialorder %v635, 0.0
        %v637 = vmul.f32 %v635, 0.1
        %v638 = vsel %vm636, %v635, %v637
        %639 = vst [vmem:[%s396] sm:$0xf] %v638
        %s640 = sand.u32 %s217, 1
        %s641 = scalar_lea.sflag [#allocation4], %s640
        %s642 = sand.u32 %s217, 1
        %s643 = smul.addr %s642, 4
        %s644 = scalar_lea.vmem [#allocation8], %s643
        // Predicated region
        $region61: #{tpu_custom_call.1} parent=47 // pred_check
          %p645 = pneg %p227
        $region62: #{tpu_custom_call.1} parent=47 // pred_check_branch
          %647 = sbr.rel (%p645) target = $region64
        $region63: #{tpu_custom_call.1} parent=47 // pred_region
          %649 = vsyncadd %s641, 0
          %s650 = smul.addr %s31, 2
          %s651 = sadd.s32 %s32, %s650
          %s652 = smul.addr %s651, 4
          %s653 = scalar_lea.hbm %s7, %s652
          %s655 = sshll.u32 %s644, 4
          %s656 = int_to_ptr.vmem [resolvable:$true] %s655
          %s657 = sshll.u32 %s653, 4
          %s658 = int_to_ptr.hbm [resolvable:$true] %s657
          %660 = dma.vmem_to_hbm [thread:$0]  %s656, 64, %s658, %s641
        $region64: #{tpu_custom_call.1} parent=47 // pred_fallthru
          _
      $region48: #{tpu_custom_call.1} parent=5 // pred_fallthru
        _
      %p661 = scmp.le.s32.totalorder 2, %s22
      // Predicated region
      $region65: #{tpu_custom_call.1} parent=5 // pred_check
        %p662 = pneg %p661
      $region66: #{tpu_custom_call.1} parent=5 // pred_check_branch
        %664 = sbr.rel (%p662) target = $region68
      $region67: #{tpu_custom_call.1} parent=5 // pred_region
        %s665 = ssub.s32 %s22, 2
        // Predicated region
        $region69: #{tpu_custom_call.1} parent=67 // pred_check
          %p666 = pneg %p233
        $region70: #{tpu_custom_call.1} parent=67 // pred_check_branch
          %668 = sbr.rel (%p666) target = $region72
        $region71: #{tpu_custom_call.1} parent=67 // pred_region
          %s669 = sand.u32 %s218, 1
          %s670 = scalar_lea.sflag [#allocation4], %s669
          %s671 = sand.u32 %s218, 1
          %s672 = smul.addr %s671, 4
          %s673 = scalar_lea.vmem [#allocation8], %s672
          %675 = dma.done %s670, 64
        $region72: #{tpu_custom_call.1} parent=67 // pred_fallthru
          _
      $region68: #{tpu_custom_call.1} parent=5 // pred_fallthru
        _
    $region6: #{tpu_custom_call.1} parent=1 // loop_footer
      %s26 = sadd.s32 1, %s22
    $region7: #{tpu_custom_call.1} parent=1 // loop_footer_branch
      %21 = sbr.rel target = $region3
    $region8: #{tpu_custom_call.1} parent=1 // loop_exit
      _
    %676 = vsyncpa [#allocation3], 1
    %s677 = scalar_lea.sflag [#allocation3], 1
    %678 = vsyncpa %s677, 1
    %679 = vsyncpa [#allocation6], 1
    %s680 = scalar_lea.sflag [#allocation6], 1
    %681 = vsyncpa %s680, 1
    %682 = vsyncpa [#allocation4], 1
    %s683 = scalar_lea.sflag [#allocation4], 1
    %684 = vsyncpa %s683, 1

</llo_original>
